<compile_context>
chip_gen: v5e
topology: v5e:2x2
jax: 0.10.0
libtpu: 0.0.40
codegen_flags: <defaults>
</compile_context>

<pallas_src>
import functools

import jax
import jax.numpy as jnp
from jax.experimental import pallas as pl
from jax.experimental.pallas import tpu as pltpu

NUM_SOURCE = 3.0
GAMMA = 0.1
_LANE = 128
_NCORES = 2          # leading "parallel" grid axis (neutral on 1-TC chips)
_MAX_TB = 8192       # large tiles amortize the ~0.35 us per-grid-step overhead


def _round_up(x, m):
    return ((x + m - 1) // m) * m


def _make_m3sda_kernel(total_batch: int, tile_batch: int, tiles_per_core: int):
    """Kernel body with static batch / tile / per-core-tile counts baked in."""
    needs_mask = (_NCORES * tiles_per_core * tile_batch) != total_batch

    def kernel(lab_ref,
               e1_ref, e2_ref, e3_ref, et_ref,
               o1_ref, o2_ref, o3_ref,
               cls_ref, md_ref,
               acc_ce, acc_sse):
        c = pl.program_id(0)
        t = pl.program_id(1)

        @pl.when(t == 0)
        def _init():
            acc_ce[...] = jnp.zeros_like(acc_ce)
            acc_sse[...] = jnp.zeros_like(acc_sse)

        if needs_mask:
            tile_id = c * tiles_per_core + t
            row = (jax.lax.broadcasted_iota(jnp.int32, (tile_batch, 1), 0)
                   + tile_id * tile_batch)
            valid = row < total_batch                       # (TB, 1) bool
            mask = lambda x: jnp.where(valid, x, 0.0)
        else:
            mask = lambda x: x

        # ---- MD loss: all-pairs SSE identity over {e1, e2, e3, et} --------
        #   sum_{i<j} ||xi - xj||^2 = 4 * sum_i ||xi||^2 - ||sum_i xi||^2
        # Each embedding tile is loaded, cast and masked exactly once.
        a1 = mask(e1_ref[...].astype(jnp.float32))
        a2 = mask(e2_ref[...].astype(jnp.float32))
        a3 = mask(e3_ref[...].astype(jnp.float32))
        at = mask(et_ref[...].astype(jnp.float32))
        s = a1 + a2 + a3 + at
        sq = a1 * a1 + a2 * a2 + a3 * a3 + at * at
        q = 4.0 * sq - s * s                                # (TB, E)
        acc_sse[...] += jnp.sum(q, axis=-1, keepdims=True)  # (TB, 1)

        # ---- classification loss: per-row (logsumexp - picked), 3 heads ---
        labels = lab_ref[...]                               # (TB, 3) int32

        def ce_rows(o_ref, lab_col):
            logits = o_ref[...].astype(jnp.float32)         # (TB, C)
            m = jnp.max(logits, axis=-1, keepdims=True)
            lse = m + jnp.log(
                jnp.sum(jnp.exp(logits - m), axis=-1, keepdims=True))
            cls_idx = jax.lax.broadcasted_iota(jnp.int32, logits.shape, 1)
            picked = jnp.sum(jnp.where(cls_idx == lab_col, logits, 0.0),
                             axis=-1, keepdims=True)
            return lse - picked                             # (TB, 1)

        ce = (ce_rows(o1_ref, labels[:, 0:1])
              + ce_rows(o2_ref, labels[:, 1:2])
              + ce_rows(o3_ref, labels[:, 2:3]))
        acc_ce[...] += mask(ce)

        @pl.when(t == tiles_per_core - 1)
        def _finalize():
            # Raw per-core partial sums; 1/B and gamma/(B*E*3) are applied in
            # the wrapper after adding the per-core partials.
            cls_ref[...] = (jnp.zeros((1, 8, _LANE), jnp.float32)
                            + jnp.sum(acc_ce[...]))
            md_ref[...] = (jnp.zeros((1, 8, _LANE), jnp.float32)
                           + jnp.sum(acc_sse[...]))

    return kernel


def _vmem_capacity_bytes() -> int:
    """Per-generation VMEM capacity; conservative fallback = v7x (64 MiB)."""
    try:
        info = pltpu.get_tpu_info()
        for attr in ("vmem_capacity_bytes", "vmem_capacity", "vmem_bytes"):
            v = getattr(info, attr, None)
            if v:
                return int(v)
    except Exception:
        pass
    return 64 << 20


def _pick_batch_tile(B, E, C, e_bytes, o_bytes, sublane, vmem_limit):
    """Padding-aware VMEM accounting for the 8 double-buffered streams."""
    emb_row = _round_up(E, _LANE) * e_bytes        # each embedding stream
    log_row = _round_up(C, _LANE) * o_bytes        # each logit stream
    lab_row = _LANE * 4                            # packed (TB,3) int32 tile
    acc_row = 2 * _LANE * 4                        # two (TB,1) f32 accumulators
    per_row = 2 * (4 * emb_row + 3 * log_row + lab_row) + acc_row
    budget = (vmem_limit * 2) // 3                 # headroom for outputs/compiler
    tb = budget // per_row
    tb = max(sublane, min(_MAX_TB, int(tb)))
    tb = (tb // sublane) * sublane
    return B if tb >= B else tb


@functools.partial(jax.jit, static_argnames=("batch_tile",))
def m3sda_loss(e1, e2, e3, et, out_1, out_2, out_3,
               label_1, label_2, label_3, *, batch_tile=None):
    B, E = e1.shape
    C = out_1.shape[-1]

    # Pack the three label vectors into one (B, 3) int32 stream.
    labels = jnp.stack([label_1, label_2, label_3], axis=-1).astype(jnp.int32)

    vmem_cap = _vmem_capacity_bytes()
    vmem_limit = int(min(vmem_cap * 3 // 4, 96 << 20))

    # Native sublane pack for the narrowest streamed dtype.
    min_item = min(e1.dtype.itemsize, out_1.dtype.itemsize)
    sublane = 8 if min_item >= 4 else (16 if min_item == 2 else 32)

    if batch_tile is None:
        TB = _pick_batch_tile(B, E, C, e1.dtype.itemsize, out_1.dtype.itemsize,
                              sublane, vmem_limit)
    else:
        TB = max(1, int(batch_tile))
        if TB < B:
            TB = max(sublane, (TB // sublane) * sublane)   # enforce (8,128) rule
        if TB >= B:
            TB = B                                         # full-dim block is ok

    n_tiles = pl.cdiv(B, TB)
    TPC = pl.cdiv(n_tiles, _NCORES)            # tiles per core

    def tile_map(c, t):
        # Clamp dummy tiles (when NCORES*TPC > n_tiles) onto a valid block;
        # the row-validity mask zeroes their contribution.
        return (jnp.minimum(c * TPC + t, n_tiles - 1), 0)

    emb_spec = pl.BlockSpec((TB, E), tile_map)
    logit_spec = pl.BlockSpec((TB, C), tile_map)
    label_spec = pl.BlockSpec((TB, 3), tile_map)
    part_spec = pl.BlockSpec((1, 8, _LANE), lambda c, t: (c, 0, 0))

    in_bytes = sum(int(x.size) * x.dtype.itemsize
                   for x in (e1, e2, e3, et, out_1, out_2, out_3)) + 3 * B * 4
    cost = pl.CostEstimate(
        flops=int(13 * B * E + 15 * B * C),
        transcendentals=int(3 * B * C + 3 * B),
        bytes_accessed=int(in_bytes) + 2 * _NCORES * 8 * _LANE * 4)

    cls_part, md_part = pl.pallas_call(
        _make_m3sda_kernel(B, TB, TPC),
        out_shape=(jax.ShapeDtypeStruct((_NCORES, 8, _LANE), jnp.float32),
                   jax.ShapeDtypeStruct((_NCORES, 8, _LANE), jnp.float32)),
        grid=(_NCORES, TPC),
        in_specs=[label_spec,
                  emb_spec, emb_spec, emb_spec, emb_spec,
                  logit_spec, logit_spec, logit_spec],
        out_specs=(part_spec, part_spec),
        scratch_shapes=[pltpu.VMEM((TB, 1), jnp.float32),
                        pltpu.VMEM((TB, 1), jnp.float32)],
        compiler_params=pltpu.CompilerParams(
            dimension_semantics=("parallel", "arbitrary"),
            vmem_limit_bytes=vmem_limit),
        cost_estimate=cost,
    )(labels, e1, e2, e3, et, out_1, out_2, out_3)

    inv_b = 1.0 / float(B)
    md_scale = GAMMA / (float(B) * float(E) * NUM_SOURCE)
    cls_loss = jnp.sum(cls_part[:, 0, 0]) * inv_b
    md_loss = jnp.sum(md_part[:, 0, 0]) * md_scale
    return cls_loss, md_loss


def _reference(e1, e2, e3, et, o1, o2, o3, l1, l2, l3):
    def ce(o, l):
        lse = jax.scipy.special.logsumexp(o, axis=-1)
        picked = jnp.take_along_axis(o, l[:, None], axis=-1)[:, 0]
        return jnp.mean(lse - picked)

    def mse(a, b):
        return jnp.mean((a - b) ** 2)

    cls = ce(o1, l1) + ce(o2, l2) + ce(o3, l3)
    md = (mse(e1, et) + mse(e2, et) + mse(e3, et)) / NUM_SOURCE
    md += (mse(e1, e2) + mse(e2, e3) + mse(e3, e1)) / NUM_SOURCE
    return cls, md * GAMMA


if __name__ == "__main__":
    key = jax.random.PRNGKey(0)
    B, E, C = 12, 32, 16   # B=12 so the forced-tile test exercises tail masking
    ks = jax.random.split(key, 10)

    e1 = jax.random.normal(ks[0], (B, E), jnp.float32)
    e2 = jax.random.normal(ks[1], (B, E), jnp.float32)
    e3 = jax.random.normal(ks[2], (B, E), jnp.float32)
    et = jax.random.normal(ks[3], (B, E), jnp.float32)
    o1 = jax.random.normal(ks[4], (B, C), jnp.float32)
    o2 = jax.random.normal(ks[5], (B, C), jnp.float32)
    o3 = jax.random.normal(ks[6], (B, C), jnp.float32)
    l1 = jax.random.randint(ks[7], (B,), 0, C, jnp.int32)
    l2 = jax.random.randint(ks[8], (B,), 0, C, jnp.int32)
    l3 = jax.random.randint(ks[9], (B,), 0, C, jnp.int32)

    ref_cls, ref_md = _reference(e1, e2, e3, et, o1, o2, o3, l1, l2, l3)

    # 1) auto-sized tile (full batch fits in one block at these shapes)
    cls_a, md_a = jax.block_until_ready(
        m3sda_loss(e1, e2, e3, et, o1, o2, o3, l1, l2, l3))
    # 2) forced small tile -> multi-tile streaming path + tail-row masking
    cls_b, md_b = jax.block_until_ready(
        m3sda_loss(e1, e2, e3, et, o1, o2, o3, l1, l2, l3, batch_tile=8))

    for got, want in ((cls_a, ref_cls), (md_a, ref_md),
                      (cls_b, ref_cls), (md_b, ref_md)):
        assert jnp.allclose(got, want, rtol=1e-5, atol=1e-5), (got, want)

    print("KERNEL_OK")
</pallas_src>

<mosaic_0001>
module attributes {stable_mosaic.version = 11 : i64} {
  func.func @kernel(%arg0: i32, %arg1: i32, %arg2: memref<12x3xi32, #tpu.memory_space<vmem>>, %arg3: memref<12x32xf32, #tpu.memory_space<vmem>>, %arg4: memref<12x32xf32, #tpu.memory_space<vmem>>, %arg5: memref<12x32xf32, #tpu.memory_space<vmem>>, %arg6: memref<12x32xf32, #tpu.memory_space<vmem>>, %arg7: memref<12x16xf32, #tpu.memory_space<vmem>>, %arg8: memref<12x16xf32, #tpu.memory_space<vmem>>, %arg9: memref<12x16xf32, #tpu.memory_space<vmem>>, %arg10: memref<1x8x128xf32, #tpu.memory_space<vmem>>, %arg11: memref<1x8x128xf32, #tpu.memory_space<vmem>>, %arg12: memref<12x1xf32, #tpu.memory_space<vmem>>, %arg13: memref<12x1xf32, #tpu.memory_space<vmem>>) attributes {dimension_semantics = [#tpu.dimension_semantics<parallel>, #tpu.dimension_semantics<arbitrary>], iteration_bounds = array<i64: 2, 1>, scalar_prefetch = 0 : i64, scratch_operands = 2 : i64, tpu.core_type = #tpu.core_type<tc>, window_params = [{transform_indices = @transform_0, window_bounds = array<i64: 12, 3>}, {transform_indices = @transform_1, window_bounds = array<i64: 12, 32>}, {transform_indices = @transform_2, window_bounds = array<i64: 12, 32>}, {transform_indices = @transform_3, window_bounds = array<i64: 12, 32>}, {transform_indices = @transform_4, window_bounds = array<i64: 12, 32>}, {transform_indices = @transform_5, window_bounds = array<i64: 12, 16>}, {transform_indices = @transform_6, window_bounds = array<i64: 12, 16>}, {transform_indices = @transform_7, window_bounds = array<i64: 12, 16>}, {transform_indices = @transform_8, window_bounds = array<i64: 1, 8, 128>}, {transform_indices = @transform_9, window_bounds = array<i64: 1, 8, 128>}]} {
    %c0_i32 = arith.constant 0 : i32
    %0 = arith.cmpi eq, %arg1, %c0_i32 : i32
    %1 = arith.extui %0 : i1 to i32
    %c0_i32_0 = arith.constant 0 : i32
    %2 = arith.cmpi ne, %1, %c0_i32_0 : i32
    scf.if %2 {
      %cst_45 = arith.constant 0.000000e+00 : f32
      %118 = vector.broadcast %cst_45 : f32 to vector<12x1xf32>
      %c0_46 = arith.constant 0 : index
      %c0_47 = arith.constant 0 : index
      %119 = vector.load %arg12[%c0_46, %c0_47] : memref<12x1xf32, #tpu.memory_space<vmem>>, vector<12x1xf32>
      tpu.vector_store %arg12[%c0_46, %c0_47], %118 {strides = array<i32>} : memref<12x1xf32, #tpu.memory_space<vmem>>, vector<12x1xf32>,
      %cst_48 = arith.constant 0.000000e+00 : f32
      %120 = vector.broadcast %cst_48 : f32 to vector<12x1xf32>
      %c0_49 = arith.constant 0 : index
      %c0_50 = arith.constant 0 : index
      %121 = vector.load %arg13[%c0_49, %c0_50] : memref<12x1xf32, #tpu.memory_space<vmem>>, vector<12x1xf32>
      tpu.vector_store %arg13[%c0_49, %c0_50], %120 {strides = array<i32>} : memref<12x1xf32, #tpu.memory_space<vmem>>, vector<12x1xf32>,
    } else {
    }
    %c1_i32 = arith.constant 1 : i32
    %3 = arith.muli %arg0, %c1_i32 : i32
    %4 = arith.addi %3, %arg1 : i32
    %5 = tpu.iota {dimensions = array<i32: 0>} : vector<12x1xi32>
    %c12_i32 = arith.constant 12 : i32
    %6 = arith.muli %4, %c12_i32 : i32
    %7 = vector.broadcast %6 : i32 to vector<12x1xi32>
    %8 = arith.addi %5, %7 : vector<12x1xi32>
    %c12_i32_1 = arith.constant 12 : i32
    %9 = vector.broadcast %c12_i32_1 : i32 to vector<12x1xi32>
    %10 = arith.cmpi slt, %8, %9 : vector<12x1xi32>
    %c0 = arith.constant 0 : index
    %c0_2 = arith.constant 0 : index
    %11 = vector.load %arg3[%c0, %c0_2] : memref<12x32xf32, #tpu.memory_space<vmem>>, vector<12x32xf32>
    %cst = arith.constant 0.000000e+00 : f32
    %12 = vector.shape_cast %10 : vector<12x1xi1> to vector<12x1xi1>
    %13 = vector.broadcast %12 : vector<12x1xi1> to vector<12x32xi1>
    %14 = vector.broadcast %cst : f32 to vector<12x32xf32>
    %15 = arith.select %13, %11, %14 : vector<12x32xi1>, vector<12x32xf32>
    %c0_3 = arith.constant 0 : index
    %c0_4 = arith.constant 0 : index
    %16 = vector.load %arg4[%c0_3, %c0_4] : memref<12x32xf32, #tpu.memory_space<vmem>>, vector<12x32xf32>
    %cst_5 = arith.constant 0.000000e+00 : f32
    %17 = vector.shape_cast %10 : vector<12x1xi1> to vector<12x1xi1>
    %18 = vector.broadcast %17 : vector<12x1xi1> to vector<12x32xi1>
    %19 = vector.broadcast %cst_5 : f32 to vector<12x32xf32>
    %20 = arith.select %18, %16, %19 : vector<12x32xi1>, vector<12x32xf32>
    %c0_6 = arith.constant 0 : index
    %c0_7 = arith.constant 0 : index
    %21 = vector.load %arg5[%c0_6, %c0_7] : memref<12x32xf32, #tpu.memory_space<vmem>>, vector<12x32xf32>
    %cst_8 = arith.constant 0.000000e+00 : f32
    %22 = vector.shape_cast %10 : vector<12x1xi1> to vector<12x1xi1>
    %23 = vector.broadcast %22 : vector<12x1xi1> to vector<12x32xi1>
    %24 = vector.broadcast %cst_8 : f32 to vector<12x32xf32>
    %25 = arith.select %23, %21, %24 : vector<12x32xi1>, vector<12x32xf32>
    %c0_9 = arith.constant 0 : index
    %c0_10 = arith.constant 0 : index
    %26 = vector.load %arg6[%c0_9, %c0_10] : memref<12x32xf32, #tpu.memory_space<vmem>>, vector<12x32xf32>
    %cst_11 = arith.constant 0.000000e+00 : f32
    %27 = vector.shape_cast %10 : vector<12x1xi1> to vector<12x1xi1>
    %28 = vector.broadcast %27 : vector<12x1xi1> to vector<12x32xi1>
    %29 = vector.broadcast %cst_11 : f32 to vector<12x32xf32>
    %30 = arith.select %28, %26, %29 : vector<12x32xi1>, vector<12x32xf32>
    %31 = arith.addf %15, %20 : vector<12x32xf32>
    %32 = arith.addf %31, %25 : vector<12x32xf32>
    %33 = arith.addf %32, %30 : vector<12x32xf32>
    %34 = arith.mulf %15, %15 : vector<12x32xf32>
    %35 = arith.mulf %20, %20 : vector<12x32xf32>
    %36 = arith.addf %34, %35 : vector<12x32xf32>
    %37 = arith.mulf %25, %25 : vector<12x32xf32>
    %38 = arith.addf %36, %37 : vector<12x32xf32>
    %39 = arith.mulf %30, %30 : vector<12x32xf32>
    %40 = arith.addf %38, %39 : vector<12x32xf32>
    %cst_12 = arith.constant 4.000000e+00 : f32
    %41 = vector.broadcast %cst_12 : f32 to vector<12x32xf32>
    %42 = arith.mulf %41, %40 : vector<12x32xf32>
    %43 = arith.mulf %33, %33 : vector<12x32xf32>
    %44 = arith.subf %42, %43 : vector<12x32xf32>
    %c0_13 = arith.constant 0 : index
    %c0_14 = arith.constant 0 : index
    %45 = vector.load %arg13[%c0_13, %c0_14] : memref<12x1xf32, #tpu.memory_space<vmem>>, vector<12x1xf32>
    %cst_15 = arith.constant dense<0.000000e+00> : vector<12xf32>
    %46 = vector.multi_reduction <add>, %44, %cst_15 [1] : vector<12x32xf32> to vector<12xf32>
    %47 = vector.shape_cast %46 : vector<12xf32> to vector<12x1xf32>
    %48 = arith.addf %45, %47 : vector<12x1xf32>
    %c0_16 = arith.constant 0 : index
    %c0_17 = arith.constant 0 : index
    %49 = vector.load %arg13[%c0_16, %c0_17] : memref<12x1xf32, #tpu.memory_space<vmem>>, vector<12x1xf32>
    tpu.vector_store %arg13[%c0_16, %c0_17], %48 {strides = array<i32>} : memref<12x1xf32, #tpu.memory_space<vmem>>, vector<12x1xf32>,
    %c0_18 = arith.constant 0 : index
    %c0_19 = arith.constant 0 : index
    %50 = vector.load %arg2[%c0_18, %c0_19] : memref<12x3xi32, #tpu.memory_space<vmem>>, vector<12x3xi32>
    %51 = vector.extract_strided_slice %50 {offsets = [0, 0], sizes = [12, 1], strides = [1, 1]} : vector<12x3xi32> to vector<12x1xi32>
    %c0_20 = arith.constant 0 : index
    %c0_21 = arith.constant 0 : index
    %52 = vector.load %arg7[%c0_20, %c0_21] : memref<12x16xf32, #tpu.memory_space<vmem>>, vector<12x16xf32>
    %cst_22 = arith.constant dense<0xFF800000> : vector<12xf32>
    %53 = vector.multi_reduction <maximumf>, %52, %cst_22 [1] : vector<12x16xf32> to vector<12xf32>
    %54 = vector.shape_cast %53 : vector<12xf32> to vector<12x1xf32>
    %55 = vector.broadcast %54 : vector<12x1xf32> to vector<12x16xf32>
    %56 = arith.subf %52, %55 : vector<12x16xf32>
    %57 = math.exp %56 : vector<12x16xf32>
    %cst_23 = arith.constant dense<0.000000e+00> : vector<12xf32>
    %58 = vector.multi_reduction <add>, %57, %cst_23 [1] : vector<12x16xf32> to vector<12xf32>
    %59 = vector.shape_cast %58 : vector<12xf32> to vector<12x1xf32>
    %60 = math.log %59 : vector<12x1xf32>
    %61 = arith.addf %54, %60 : vector<12x1xf32>
    %62 = tpu.iota {dimensions = array<i32: 1>} : vector<12x16xi32>
    %63 = vector.broadcast %51 : vector<12x1xi32> to vector<12x16xi32>
    %64 = arith.cmpi eq, %62, %63 : vector<12x16xi32>
    %cst_24 = arith.constant 0.000000e+00 : f32
    %65 = vector.broadcast %cst_24 : f32 to vector<12x16xf32>
    %66 = arith.select %64, %52, %65 : vector<12x16xi1>, vector<12x16xf32>
    %cst_25 = arith.constant dense<0.000000e+00> : vector<12xf32>
    %67 = vector.multi_reduction <add>, %66, %cst_25 [1] : vector<12x16xf32> to vector<12xf32>
    %68 = vector.shape_cast %67 : vector<12xf32> to vector<12x1xf32>
    %69 = arith.subf %61, %68 : vector<12x1xf32>
    %70 = vector.extract_strided_slice %50 {offsets = [0, 1], sizes = [12, 1], strides = [1, 1]} : vector<12x3xi32> to vector<12x1xi32>
    %c0_26 = arith.constant 0 : index
    %c0_27 = arith.constant 0 : index
    %71 = vector.load %arg8[%c0_26, %c0_27] : memref<12x16xf32, #tpu.memory_space<vmem>>, vector<12x16xf32>
    %cst_28 = arith.constant dense<0xFF800000> : vector<12xf32>
    %72 = vector.multi_reduction <maximumf>, %71, %cst_28 [1] : vector<12x16xf32> to vector<12xf32>
    %73 = vector.shape_cast %72 : vector<12xf32> to vector<12x1xf32>
    %74 = vector.broadcast %73 : vector<12x1xf32> to vector<12x16xf32>
    %75 = arith.subf %71, %74 : vector<12x16xf32>
    %76 = math.exp %75 : vector<12x16xf32>
    %cst_29 = arith.constant dense<0.000000e+00> : vector<12xf32>
    %77 = vector.multi_reduction <add>, %76, %cst_29 [1] : vector<12x16xf32> to vector<12xf32>
    %78 = vector.shape_cast %77 : vector<12xf32> to vector<12x1xf32>
    %79 = math.log %78 : vector<12x1xf32>
    %80 = arith.addf %73, %79 : vector<12x1xf32>
    %81 = tpu.iota {dimensions = array<i32: 1>} : vector<12x16xi32>
    %82 = vector.broadcast %70 : vector<12x1xi32> to vector<12x16xi32>
    %83 = arith.cmpi eq, %81, %82 : vector<12x16xi32>
    %cst_30 = arith.constant 0.000000e+00 : f32
    %84 = vector.broadcast %cst_30 : f32 to vector<12x16xf32>
    %85 = arith.select %83, %71, %84 : vector<12x16xi1>, vector<12x16xf32>
    %cst_31 = arith.constant dense<0.000000e+00> : vector<12xf32>
    %86 = vector.multi_reduction <add>, %85, %cst_31 [1] : vector<12x16xf32> to vector<12xf32>
    %87 = vector.shape_cast %86 : vector<12xf32> to vector<12x1xf32>
    %88 = arith.subf %80, %87 : vector<12x1xf32>
    %89 = arith.addf %69, %88 : vector<12x1xf32>
    %90 = vector.extract_strided_slice %50 {offsets = [0, 2], sizes = [12, 1], strides = [1, 1]} : vector<12x3xi32> to vector<12x1xi32>
    %c0_32 = arith.constant 0 : index
    %c0_33 = arith.constant 0 : index
    %91 = vector.load %arg9[%c0_32, %c0_33] : memref<12x16xf32, #tpu.memory_space<vmem>>, vector<12x16xf32>
    %cst_34 = arith.constant dense<0xFF800000> : vector<12xf32>
    %92 = vector.multi_reduction <maximumf>, %91, %cst_34 [1] : vector<12x16xf32> to vector<12xf32>
    %93 = vector.shape_cast %92 : vector<12xf32> to vector<12x1xf32>
    %94 = vector.broadcast %93 : vector<12x1xf32> to vector<12x16xf32>
    %95 = arith.subf %91, %94 : vector<12x16xf32>
    %96 = math.exp %95 : vector<12x16xf32>
    %cst_35 = arith.constant dense<0.000000e+00> : vector<12xf32>
    %97 = vector.multi_reduction <add>, %96, %cst_35 [1] : vector<12x16xf32> to vector<12xf32>
    %98 = vector.shape_cast %97 : vector<12xf32> to vector<12x1xf32>
    %99 = math.log %98 : vector<12x1xf32>
    %100 = arith.addf %93, %99 : vector<12x1xf32>
    %101 = tpu.iota {dimensions = array<i32: 1>} : vector<12x16xi32>
    %102 = vector.broadcast %90 : vector<12x1xi32> to vector<12x16xi32>
    %103 = arith.cmpi eq, %101, %102 : vector<12x16xi32>
    %cst_36 = arith.constant 0.000000e+00 : f32
    %104 = vector.broadcast %cst_36 : f32 to vector<12x16xf32>
    %105 = arith.select %103, %91, %104 : vector<12x16xi1>, vector<12x16xf32>
    %cst_37 = arith.constant dense<0.000000e+00> : vector<12xf32>
    %106 = vector.multi_reduction <add>, %105, %cst_37 [1] : vector<12x16xf32> to vector<12xf32>
    %107 = vector.shape_cast %106 : vector<12xf32> to vector<12x1xf32>
    %108 = arith.subf %100, %107 : vector<12x1xf32>
    %109 = arith.addf %89, %108 : vector<12x1xf32>
    %c0_38 = arith.constant 0 : index
    %c0_39 = arith.constant 0 : index
    %110 = vector.load %arg12[%c0_38, %c0_39] : memref<12x1xf32, #tpu.memory_space<vmem>>, vector<12x1xf32>
    %cst_40 = arith.constant 0.000000e+00 : f32
    %111 = vector.broadcast %cst_40 : f32 to vector<12x1xf32>
    %112 = arith.select %10, %109, %111 : vector<12x1xi1>, vector<12x1xf32>
    %113 = arith.addf %110, %112 : vector<12x1xf32>
    %c0_41 = arith.constant 0 : index
    %c0_42 = arith.constant 0 : index
    %114 = vector.load %arg12[%c0_41, %c0_42] : memref<12x1xf32, #tpu.memory_space<vmem>>, vector<12x1xf32>
    tpu.vector_store %arg12[%c0_41, %c0_42], %113 {strides = array<i32>} : memref<12x1xf32, #tpu.memory_space<vmem>>, vector<12x1xf32>,
    %c0_i32_43 = arith.constant 0 : i32
    %115 = arith.cmpi eq, %arg1, %c0_i32_43 : i32
    %116 = arith.extui %115 : i1 to i32
    %c0_i32_44 = arith.constant 0 : i32
    %117 = arith.cmpi ne, %116, %c0_i32_44 : i32
    scf.if %117 {
      %cst_45 = arith.constant 0.000000e+00 : f32
      %118 = vector.broadcast %cst_45 : f32 to vector<1x8x128xf32>
      %c0_46 = arith.constant 0 : index
      %c0_47 = arith.constant 0 : index
      %119 = vector.load %arg12[%c0_46, %c0_47] : memref<12x1xf32, #tpu.memory_space<vmem>>, vector<12x1xf32>
      %120 = vector.shape_cast %119 : vector<12x1xf32> to vector<1x12x1xf32>
      %cst_48 = arith.constant dense<0.000000e+00> : vector<1xf32>
      %121 = vector.multi_reduction <add>, %120, %cst_48 [1, 2] : vector<1x12x1xf32> to vector<1xf32>
      %122 = vector.shape_cast %121 : vector<1xf32> to vector<1x1x1xf32>
      %123 = vector.extract %122[0, 0, 0] : f32 from vector<1x1x1xf32>
      %124 = vector.broadcast %123 : f32 to vector<1x8x128xf32>
      %125 = arith.addf %118, %124 : vector<1x8x128xf32>
      %c0_49 = arith.constant 0 : index
      %c0_50 = arith.constant 0 : index
      %c0_51 = arith.constant 0 : index
      %126 = vector.load %arg10[%c0_49, %c0_50, %c0_51] : memref<1x8x128xf32, #tpu.memory_space<vmem>>, vector<1x8x128xf32>
      tpu.vector_store %arg10[%c0_49, %c0_50, %c0_51], %125 {strides = array<i32>} : memref<1x8x128xf32, #tpu.memory_space<vmem>>, vector<1x8x128xf32>,
      %cst_52 = arith.constant 0.000000e+00 : f32
      %127 = vector.broadcast %cst_52 : f32 to vector<1x8x128xf32>
      %c0_53 = arith.constant 0 : index
      %c0_54 = arith.constant 0 : index
      %128 = vector.load %arg13[%c0_53, %c0_54] : memref<12x1xf32, #tpu.memory_space<vmem>>, vector<12x1xf32>
      %129 = vector.shape_cast %128 : vector<12x1xf32> to vector<1x12x1xf32>
      %cst_55 = arith.constant dense<0.000000e+00> : vector<1xf32>
      %130 = vector.multi_reduction <add>, %129, %cst_55 [1, 2] : vector<1x12x1xf32> to vector<1xf32>
      %131 = vector.shape_cast %130 : vector<1xf32> to vector<1x1x1xf32>
      %132 = vector.extract %131[0, 0, 0] : f32 from vector<1x1x1xf32>
      %133 = vector.broadcast %132 : f32 to vector<1x8x128xf32>
      %134 = arith.addf %127, %133 : vector<1x8x128xf32>
      %c0_56 = arith.constant 0 : index
      %c0_57 = arith.constant 0 : index
      %c0_58 = arith.constant 0 : index
      %135 = vector.load %arg11[%c0_56, %c0_57, %c0_58] : memref<1x8x128xf32, #tpu.memory_space<vmem>>, vector<1x8x128xf32>
      tpu.vector_store %arg11[%c0_56, %c0_57, %c0_58], %134 {strides = array<i32>} : memref<1x8x128xf32, #tpu.memory_space<vmem>>, vector<1x8x128xf32>,
    } else {
    }
    return
  }
  func.func @transform_0(%arg0: i32, %arg1: i32) -> (i32, i32) {
    %c1_i32 = arith.constant 1 : i32
    %0 = arith.muli %arg0, %c1_i32 : i32
    %1 = arith.addi %0, %arg1 : i32
    %c0_i32 = arith.constant 0 : i32
    %2 = arith.minsi %1, %c0_i32 : i32
    %c0_i32_0 = arith.constant 0 : i32
    %c0_i32_1 = arith.constant 0 : i32
    return %2, %c0_i32_0 : i32, i32
  }
  func.func @transform_1(%arg0: i32, %arg1: i32) -> (i32, i32) {
    %c1_i32 = arith.constant 1 : i32
    %0 = arith.muli %arg0, %c1_i32 : i32
    %1 = arith.addi %0, %arg1 : i32
    %c0_i32 = arith.constant 0 : i32
    %2 = arith.minsi %1, %c0_i32 : i32
    %c0_i32_0 = arith.constant 0 : i32
    %c0_i32_1 = arith.constant 0 : i32
    return %2, %c0_i32_0 : i32, i32
  }
  func.func @transform_2(%arg0: i32, %arg1: i32) -> (i32, i32) {
    %c1_i32 = arith.constant 1 : i32
    %0 = arith.muli %arg0, %c1_i32 : i32
    %1 = arith.addi %0, %arg1 : i32
    %c0_i32 = arith.constant 0 : i32
    %2 = arith.minsi %1, %c0_i32 : i32
    %c0_i32_0 = arith.constant 0 : i32
    %c0_i32_1 = arith.constant 0 : i32
    return %2, %c0_i32_0 : i32, i32
  }
  func.func @transform_3(%arg0: i32, %arg1: i32) -> (i32, i32) {
    %c1_i32 = arith.constant 1 : i32
    %0 = arith.muli %arg0, %c1_i32 : i32
    %1 = arith.addi %0, %arg1 : i32
    %c0_i32 = arith.constant 0 : i32
    %2 = arith.minsi %1, %c0_i32 : i32
    %c0_i32_0 = arith.constant 0 : i32
    %c0_i32_1 = arith.constant 0 : i32
    return %2, %c0_i32_0 : i32, i32
  }
  func.func @transform_4(%arg0: i32, %arg1: i32) -> (i32, i32) {
    %c1_i32 = arith.constant 1 : i32
    %0 = arith.muli %arg0, %c1_i32 : i32
    %1 = arith.addi %0, %arg1 : i32
    %c0_i32 = arith.constant 0 : i32
    %2 = arith.minsi %1, %c0_i32 : i32
    %c0_i32_0 = arith.constant 0 : i32
    %c0_i32_1 = arith.constant 0 : i32
    return %2, %c0_i32_0 : i32, i32
  }
  func.func @transform_5(%arg0: i32, %arg1: i32) -> (i32, i32) {
    %c1_i32 = arith.constant 1 : i32
    %0 = arith.muli %arg0, %c1_i32 : i32
    %1 = arith.addi %0, %arg1 : i32
    %c0_i32 = arith.constant 0 : i32
    %2 = arith.minsi %1, %c0_i32 : i32
    %c0_i32_0 = arith.constant 0 : i32
    %c0_i32_1 = arith.constant 0 : i32
    return %2, %c0_i32_0 : i32, i32
  }
  func.func @transform_6(%arg0: i32, %arg1: i32) -> (i32, i32) {
    %c1_i32 = arith.constant 1 : i32
    %0 = arith.muli %arg0, %c1_i32 : i32
    %1 = arith.addi %0, %arg1 : i32
    %c0_i32 = arith.constant 0 : i32
    %2 = arith.minsi %1, %c0_i32 : i32
    %c0_i32_0 = arith.constant 0 : i32
    %c0_i32_1 = arith.constant 0 : i32
    return %2, %c0_i32_0 : i32, i32
  }
  func.func @transform_7(%arg0: i32, %arg1: i32) -> (i32, i32) {
    %c1_i32 = arith.constant 1 : i32
    %0 = arith.muli %arg0, %c1_i32 : i32
    %1 = arith.addi %0, %arg1 : i32
    %c0_i32 = arith.constant 0 : i32
    %2 = arith.minsi %1, %c0_i32 : i32
    %c0_i32_0 = arith.constant 0 : i32
    %c0_i32_1 = arith.constant 0 : i32
    return %2, %c0_i32_0 : i32, i32
  }
  func.func @transform_8(%arg0: i32, %arg1: i32) -> (i32, i32, i32) {
    %c0_i32 = arith.constant 0 : i32
    %c0_i32_0 = arith.constant 0 : i32
    %c0_i32_1 = arith.constant 0 : i32
    return %arg0, %c0_i32, %c0_i32_0 : i32, i32, i32
  }
  func.func @transform_9(%arg0: i32, %arg1: i32) -> (i32, i32, i32) {
    %c0_i32 = arith.constant 0 : i32
    %c0_i32_0 = arith.constant 0 : i32
    %c0_i32_1 = arith.constant 0 : i32
    return %arg0, %c0_i32, %c0_i32_0 : i32, i32, i32
  }
}

</mosaic_0001>

<llo_original>
// kernel: m3sda_loss.1
$region0: #{m3sda_loss.1}
  #allocation0 [shape = 'u32[]', space=smem, size = 0x4, offset = 0x4, fixed_abs, tag = 'smem constant byte address 0x4 - core index']
  #allocation1 [shape = 'u32[72,128]{1,0:T(1,128)}', space=vmem, size = 0x9000, scoped, tag = 'internal scratch']
  #allocation2 [shape = 'f32[12,1]{1,0:T(8,128)}', space=vmem, size = 0x2000, scoped, tag = 'scratch operand']
  #allocation3 [shape = 'f32[12,1]{1,0:T(8,128)}', space=vmem, size = 0x2000, scoped, tag = 'scratch operand']
  %s0 = inlined_call_operand.vmem [shape: s32[12,3], index: 0, kind: input, shape index: {}]
  %s1 = inlined_call_operand.vmem [shape: f32[12,32], index: 1, kind: input, shape index: {}]
  %s2 = inlined_call_operand.hbm [shape: f32[12,32], index: 2, kind: input, shape index: {}]
  %s3 = inlined_call_operand.hbm [shape: f32[12,32], index: 3, kind: input, shape index: {}]
  %s4 = inlined_call_operand.vmem [shape: f32[12,32], index: 4, kind: input, shape index: {}]
  %s5 = inlined_call_operand.hbm [shape: f32[12,16], index: 5, kind: input, shape index: {}]
  %s6 = inlined_call_operand.hbm [shape: f32[12,16], index: 6, kind: input, shape index: {}]
  %s7 = inlined_call_operand.hbm [shape: f32[12,16], index: 7, kind: input, shape index: {}]
  %s8 = inlined_call_operand.vmem [shape: f32[2,8,128], index: 8, kind: output, shape index: {0}]
  %s9 = inlined_call_operand.vmem [shape: f32[2,8,128], index: 9, kind: output, shape index: {1}]
  %10 = xla_tuple %s8, %s9
  %s11 = sld [smem:[#allocation0]]
  $region101: #{m3sda_loss.1} parent=0
    _
  %s13 = ssub.s32 1, %s11
  %s14 = scalar_select 0, %s13, %s11
  $region1: #{m3sda_loss.1} parent=0
    #allocation4 [shape = 'u8[16384]{0}', space=vmem, size = 0x4000, scoped, tag = 'input window, operand 2']
    #allocation5 [shape = 's32[2]{0}', space=sflag, size = 0x8, scoped, tag = 'scoped memory for m3sda_loss.1']
    #allocation6 [shape = 'u8[16384]{0}', space=vmem, size = 0x4000, scoped, tag = 'input window, operand 3']
    #allocation7 [shape = 's32[2]{0}', space=sflag, size = 0x8, scoped, tag = 'scoped memory for m3sda_loss.1']
    #allocation8 [shape = 'u8[16384]{0}', space=vmem, size = 0x4000, scoped, tag = 'input window, operand 5']
    #allocation9 [shape = 'u8[16384]{0}', space=vmem, size = 0x4000, scoped, tag = 'input window, operand 6']
    #allocation10 [shape = 's32[2]{0}', space=sflag, size = 0x8, scoped, tag = 'scoped memory for m3sda_loss.1']
    #allocation11 [shape = 'u8[16384]{0}', space=vmem, size = 0x4000, scoped, tag = 'input window, operand 7']
    %15 = vsyncpa [#allocation5], 0
    %s16 = scalar_lea.sflag [#allocation5], 1
    %17 = vsyncpa %s16, 0
    %18 = vsyncpa [#allocation7], 0
    %s19 = scalar_lea.sflag [#allocation7], 1
    %20 = vsyncpa %s19, 0
    %21 = vsyncpa [#allocation10], 0
    %s22 = scalar_lea.sflag [#allocation10], 1
    %23 = vsyncpa %s22, 0
    loop: start=0, step=1, limit=4
    $region2: #{m3sda_loss.1} parent=1 // loop_pre_header
      _
    $region3: #{m3sda_loss.1} parent=1 // loop_header
      %s25 = sphi 0, %s29
      %p26 = scmp.ge.s32.totalorder %s25, 4
      %s32 = sphi 0, %s44
      %s33 = sphi 0, %s40
      %s34 = sphi 0, %s32
      %s35 = sphi 0, %s33
      %s36 = sphi 0, %s34
      %s37 = sphi 0, %s35
      %s53 = sphi 0, %s55
      %s56 = sphi 0, %s53
      %s57 = sphi 0, %s56
      %s73 = sphi 0, %s57
      %s85 = sphi 0, %s87
      %s88 = sphi 0, %s85
      %s89 = sphi 0, %s88
      %s105 = sphi 0, %s89
      %s117 = sphi 0, %s119
      %s120 = sphi 0, %s117
      %s121 = sphi 0, %s120
      %s137 = sphi 0, %s121
      %s149 = sphi 0, %s151
      %s152 = sphi 0, %s149
      %s153 = sphi 0, %s152
      %s169 = sphi 0, %s153
      %s181 = sphi 0, %s183
      %s184 = sphi 0, %s181
      %s185 = sphi 0, %s184
      %s201 = sphi 0, %s185
      %s213 = sphi 0, %s215
      %s216 = sphi 0, %s213
      %s217 = sphi 0, %s216
      %s233 = sphi 0, %s217
      %s245 = sphi 0, %s247
      %s248 = sphi 0, %s245
      %s249 = sphi 0, %s248
      %s265 = sphi 0, %s249
      %s277 = sphi 0, %s279
      %s280 = sphi 0, %s277
      %s281 = sphi 0, %s280
      %s297 = sphi 0, %s281
      %s303 = sphi 0, %s305
      %s306 = sphi 0, %s303
      %s307 = sphi 0, %s306
      %s323 = sphi 0, %s307
      %s329 = sphi 0, %s331
      %s332 = sphi 0, %s329
      %s333 = sphi 0, %s332
      %s349 = sphi 0, %s333
    $region4: #{m3sda_loss.1} parent=1 // loop_header_branch
      %28 = sbr.rel (%p26) target = $region8
    $region5: #{m3sda_loss.1} parent=1 // loop_body
      %s30 = ssub.s32 %s25, 1
      %s31 = ssub.s32 %s25, 2
      %s38 = sadd.s32 1, %s33
      %p39 = scmp.ge.s32.totalorder %s38, 1
      %s40 = scalar_select %p39, 0, %s38
      %s41 = sadd.s32 1, %s32
      %s42 = scalar_select %p39, %s41, %s32
      %p43 = scmp.ge.s32.totalorder %s42, 2
      %s44 = scalar_select %p43, 0, %s42
      %s45 = sadd.s32 %s32, %s33
      %p46 = scmp.lt.s32.totalorder %s45, 0
      %s47 = scalar_select %p46, %s45, 0
      %s48 = sadd.s32 %s44, %s40
      %p49 = scmp.lt.s32.totalorder %s48, 0
      %s50 = scalar_select %p49, %s48, 0
      %s51 = ssub.s32 %s47, %s50
      %p52 = scmp.eq.s32.totalorder %s51, 0
      %s54 = sadd.s32 %s53, 1
      %s55 = scalar_select %p52, %s53, %s54
      %p58 = pneg %p52
      %p59 = scmp.eq.s32.totalorder %s25, 1
      %p60 = por %p58, %p59
      %p61 = scmp.ne.s32.totalorder %s53, %s56
      %p62 = scmp.eq.s32.totalorder %s25, 0
      %p63 = por %p61, %p62
      %p64 = scmp.ne.s32.totalorder %s53, %s56
      %p65 = scmp.eq.s32.totalorder %s30, 1
      %p66 = por %p64, %p65
      %p67 = scmp.ne.s32.totalorder %s56, %s57
      %p68 = scmp.eq.s32.totalorder %s30, 0
      %p69 = por %p67, %p68
      %p70 = scmp.ne.s32.totalorder %s56, %s57
      %p71 = scmp.eq.s32.totalorder %s31, 1
      %p72 = por %p70, %p71
      %p74 = scmp.ne.s32.totalorder %s57, %s73
      %p75 = scmp.eq.s32.totalorder %s31, 0
      %p76 = por %p74, %p75
      %s77 = sadd.s32 %s32, %s33
      %p78 = scmp.lt.s32.totalorder %s77, 0
      %s79 = scalar_select %p78, %s77, 0
      %s80 = sadd.s32 %s44, %s40
      %p81 = scmp.lt.s32.totalorder %s80, 0
      %s82 = scalar_select %p81, %s80, 0
      %s83 = ssub.s32 %s79, %s82
      %p84 = scmp.eq.s32.totalorder %s83, 0
      %s86 = sadd.s32 %s85, 1
      %s87 = scalar_select %p84, %s85, %s86
      %p90 = pneg %p84
      %p91 = scmp.eq.s32.totalorder %s25, 1
      %p92 = por %p90, %p91
      %p93 = scmp.ne.s32.totalorder %s85, %s88
      %p94 = scmp.eq.s32.totalorder %s25, 0
      %p95 = por %p93, %p94
      %p96 = scmp.ne.s32.totalorder %s85, %s88
      %p97 = scmp.eq.s32.totalorder %s30, 1
      %p98 = por %p96, %p97
      %p99 = scmp.ne.s32.totalorder %s88, %s89
      %p100 = scmp.eq.s32.totalorder %s30, 0
      %p101 = por %p99, %p100
      %p102 = scmp.ne.s32.totalorder %s88, %s89
      %p103 = scmp.eq.s32.totalorder %s31, 1
      %p104 = por %p102, %p103
      %p106 = scmp.ne.s32.totalorder %s89, %s105
      %p107 = scmp.eq.s32.totalorder %s31, 0
      %p108 = por %p106, %p107
      %s109 = sadd.s32 %s32, %s33
      %p110 = scmp.lt.s32.totalorder %s109, 0
      %s111 = scalar_select %p110, %s109, 0
      %s112 = sadd.s32 %s44, %s40
      %p113 = scmp.lt.s32.totalorder %s112, 0
      %s114 = scalar_select %p113, %s112, 0
      %s115 = ssub.s32 %s111, %s114
      %p116 = scmp.eq.s32.totalorder %s115, 0
      %s118 = sadd.s32 %s117, 1
      %s119 = scalar_select %p116, %s117, %s118
      %p122 = pneg %p116
      %p123 = scmp.eq.s32.totalorder %s25, 1
      %p124 = por %p122, %p123
      %p125 = scmp.ne.s32.totalorder %s117, %s120
      %p126 = scmp.eq.s32.totalorder %s25, 0
      %p127 = por %p125, %p126
      %p128 = scmp.ne.s32.totalorder %s117, %s120
      %p129 = scmp.eq.s32.totalorder %s30, 1
      %p130 = por %p128, %p129
      %p131 = scmp.ne.s32.totalorder %s120, %s121
      %p132 = scmp.eq.s32.totalorder %s30, 0
      %p133 = por %p131, %p132
      %p134 = scmp.ne.s32.totalorder %s120, %s121
      %p135 = scmp.eq.s32.totalorder %s31, 1
      %p136 = por %p134, %p135
      %p138 = scmp.ne.s32.totalorder %s121, %s137
      %p139 = scmp.eq.s32.totalorder %s31, 0
      %p140 = por %p138, %p139
      %s141 = sadd.s32 %s32, %s33
      %p142 = scmp.lt.s32.totalorder %s141, 0
      %s143 = scalar_select %p142, %s141, 0
      %s144 = sadd.s32 %s44, %s40
      %p145 = scmp.lt.s32.totalorder %s144, 0
      %s146 = scalar_select %p145, %s144, 0
      %s147 = ssub.s32 %s143, %s146
      %p148 = scmp.eq.s32.totalorder %s147, 0
      %s150 = sadd.s32 %s149, 1
      %s151 = scalar_select %p148, %s149, %s150
      %p154 = pneg %p148
      %p155 = scmp.eq.s32.totalorder %s25, 1
      %p156 = por %p154, %p155
      %p157 = scmp.ne.s32.totalorder %s149, %s152
      %p158 = scmp.eq.s32.totalorder %s25, 0
      %p159 = por %p157, %p158
      %p160 = scmp.ne.s32.totalorder %s149, %s152
      %p161 = scmp.eq.s32.totalorder %s30, 1
      %p162 = por %p160, %p161
      %p163 = scmp.ne.s32.totalorder %s152, %s153
      %p164 = scmp.eq.s32.totalorder %s30, 0
      %p165 = por %p163, %p164
      %p166 = scmp.ne.s32.totalorder %s152, %s153
      %p167 = scmp.eq.s32.totalorder %s31, 1
      %p168 = por %p166, %p167
      %p170 = scmp.ne.s32.totalorder %s153, %s169
      %p171 = scmp.eq.s32.totalorder %s31, 0
      %p172 = por %p170, %p171
      %s173 = sadd.s32 %s32, %s33
      %p174 = scmp.lt.s32.totalorder %s173, 0
      %s175 = scalar_select %p174, %s173, 0
      %s176 = sadd.s32 %s44, %s40
      %p177 = scmp.lt.s32.totalorder %s176, 0
      %s178 = scalar_select %p177, %s176, 0
      %s179 = ssub.s32 %s175, %s178
      %p180 = scmp.eq.s32.totalorder %s179, 0
      %s182 = sadd.s32 %s181, 1
      %s183 = scalar_select %p180, %s181, %s182
      %p186 = pneg %p180
      %p187 = scmp.eq.s32.totalorder %s25, 1
      %p188 = por %p186, %p187
      %p189 = scmp.ne.s32.totalorder %s181, %s184
      %p190 = scmp.eq.s32.totalorder %s25, 0
      %p191 = por %p189, %p190
      %p192 = scmp.ne.s32.totalorder %s181, %s184
      %p193 = scmp.eq.s32.totalorder %s30, 1
      %p194 = por %p192, %p193
      %p195 = scmp.ne.s32.totalorder %s184, %s185
      %p196 = scmp.eq.s32.totalorder %s30, 0
      %p197 = por %p195, %p196
      %p198 = scmp.ne.s32.totalorder %s184, %s185
      %p199 = scmp.eq.s32.totalorder %s31, 1
      %p200 = por %p198, %p199
      %p202 = scmp.ne.s32.totalorder %s185, %s201
      %p203 = scmp.eq.s32.totalorder %s31, 0
      %p204 = por %p202, %p203
      %s205 = sadd.s32 %s32, %s33
      %p206 = scmp.lt.s32.totalorder %s205, 0
      %s207 = scalar_select %p206, %s205, 0
      %s208 = sadd.s32 %s44, %s40
      %p209 = scmp.lt.s32.totalorder %s208, 0
      %s210 = scalar_select %p209, %s208, 0
      %s211 = ssub.s32 %s207, %s210
      %p212 = scmp.eq.s32.totalorder %s211, 0
      %s214 = sadd.s32 %s213, 1
      %s215 = scalar_select %p212, %s213, %s214
      %p218 = pneg %p212
      %p219 = scmp.eq.s32.totalorder %s25, 1
      %p220 = por %p218, %p219
      %p221 = scmp.ne.s32.totalorder %s213, %s216
      %p222 = scmp.eq.s32.totalorder %s25, 0
      %p223 = por %p221, %p222
      %p224 = scmp.ne.s32.totalorder %s213, %s216
      %p225 = scmp.eq.s32.totalorder %s30, 1
      %p226 = por %p224, %p225
      %p227 = scmp.ne.s32.totalorder %s216, %s217
      %p228 = scmp.eq.s32.totalorder %s30, 0
      %p229 = por %p227, %p228
      %p230 = scmp.ne.s32.totalorder %s216, %s217
      %p231 = scmp.eq.s32.totalorder %s31, 1
      %p232 = por %p230, %p231
      %p234 = scmp.ne.s32.totalorder %s217, %s233
      %p235 = scmp.eq.s32.totalorder %s31, 0
      %p236 = por %p234, %p235
      %s237 = sadd.s32 %s32, %s33
      %p238 = scmp.lt.s32.totalorder %s237, 0
      %s239 = scalar_select %p238, %s237, 0
      %s240 = sadd.s32 %s44, %s40
      %p241 = scmp.lt.s32.totalorder %s240, 0
      %s242 = scalar_select %p241, %s240, 0
      %s243 = ssub.s32 %s239, %s242
      %p244 = scmp.eq.s32.totalorder %s243, 0
      %s246 = sadd.s32 %s245, 1
      %s247 = scalar_select %p244, %s245, %s246
      %p250 = pneg %p244
      %p251 = scmp.eq.s32.totalorder %s25, 1
      %p252 = por %p250, %p251
      %p253 = scmp.ne.s32.totalorder %s245, %s248
      %p254 = scmp.eq.s32.totalorder %s25, 0
      %p255 = por %p253, %p254
      %p256 = scmp.ne.s32.totalorder %s245, %s248
      %p257 = scmp.eq.s32.totalorder %s30, 1
      %p258 = por %p256, %p257
      %p259 = scmp.ne.s32.totalorder %s248, %s249
      %p260 = scmp.eq.s32.totalorder %s30, 0
      %p261 = por %p259, %p260
      %p262 = scmp.ne.s32.totalorder %s248, %s249
      %p263 = scmp.eq.s32.totalorder %s31, 1
      %p264 = por %p262, %p263
      %p266 = scmp.ne.s32.totalorder %s249, %s265
      %p267 = scmp.eq.s32.totalorder %s31, 0
      %p268 = por %p266, %p267
      %s269 = sadd.s32 %s32, %s33
      %p270 = scmp.lt.s32.totalorder %s269, 0
      %s271 = scalar_select %p270, %s269, 0
      %s272 = sadd.s32 %s44, %s40
      %p273 = scmp.lt.s32.totalorder %s272, 0
      %s274 = scalar_select %p273, %s272, 0
      %s275 = ssub.s32 %s271, %s274
      %p276 = scmp.eq.s32.totalorder %s275, 0
      %s278 = sadd.s32 %s277, 1
      %s279 = scalar_select %p276, %s277, %s278
      %p282 = pneg %p276
      %p283 = scmp.eq.s32.totalorder %s25, 1
      %p284 = por %p282, %p283
      %p285 = scmp.ne.s32.totalorder %s277, %s280
      %p286 = scmp.eq.s32.totalorder %s25, 0
      %p287 = por %p285, %p286
      %p288 = scmp.ne.s32.totalorder %s277, %s280
      %p289 = scmp.eq.s32.totalorder %s30, 1
      %p290 = por %p288, %p289
      %p291 = scmp.ne.s32.totalorder %s280, %s281
      %p292 = scmp.eq.s32.totalorder %s30, 0
      %p293 = por %p291, %p292
      %p294 = scmp.ne.s32.totalorder %s280, %s281
      %p295 = scmp.eq.s32.totalorder %s31, 1
      %p296 = por %p294, %p295
      %p298 = scmp.ne.s32.totalorder %s281, %s297
      %p299 = scmp.eq.s32.totalorder %s31, 0
      %p300 = por %p298, %p299
      %s301 = ssub.s32 %s32, %s44
      %p302 = scmp.eq.s32.totalorder %s301, 0
      %s304 = sadd.s32 %s303, 1
      %s305 = scalar_select %p302, %s303, %s304
      %p308 = pneg %p302
      %p309 = scmp.eq.s32.totalorder %s25, 1
      %p310 = por %p308, %p309
      %p311 = scmp.ne.s32.totalorder %s303, %s306
      %p312 = scmp.eq.s32.totalorder %s25, 0
      %p313 = por %p311, %p312
      %p314 = scmp.ne.s32.totalorder %s303, %s306
      %p315 = scmp.eq.s32.totalorder %s30, 1
      %p316 = por %p314, %p315
      %p317 = scmp.ne.s32.totalorder %s306, %s307
      %p318 = scmp.eq.s32.totalorder %s30, 0
      %p319 = por %p317, %p318
      %p320 = scmp.ne.s32.totalorder %s306, %s307
      %p321 = scmp.eq.s32.totalorder %s31, 1
      %p322 = por %p320, %p321
      %p324 = scmp.ne.s32.totalorder %s307, %s323
      %p325 = scmp.eq.s32.totalorder %s31, 0
      %p326 = por %p324, %p325
      %s327 = ssub.s32 %s32, %s44
      %p328 = scmp.eq.s32.totalorder %s327, 0
      %s330 = sadd.s32 %s329, 1
      %s331 = scalar_select %p328, %s329, %s330
      %p334 = pneg %p328
      %p335 = scmp.eq.s32.totalorder %s25, 1
      %p336 = por %p334, %p335
      %p337 = scmp.ne.s32.totalorder %s329, %s332
      %p338 = scmp.eq.s32.totalorder %s25, 0
      %p339 = por %p337, %p338
      %p340 = scmp.ne.s32.totalorder %s329, %s332
      %p341 = scmp.eq.s32.totalorder %s30, 1
      %p342 = por %p340, %p341
      %p343 = scmp.ne.s32.totalorder %s332, %s333
      %p344 = scmp.eq.s32.totalorder %s30, 0
      %p345 = por %p343, %p344
      %p346 = scmp.ne.s32.totalorder %s332, %s333
      %p347 = scmp.eq.s32.totalorder %s31, 1
      %p348 = por %p346, %p347
      %p350 = scmp.ne.s32.totalorder %s333, %s349
      %p351 = scmp.eq.s32.totalorder %s31, 0
      %p352 = por %p350, %p351
      %p353 = scmp.le.s32.totalorder 1, %s25
      %p354 = scmp.lt.s32.totalorder %s25, 3
      %p355 = pnand %p353, %p354
      %p356 = pneg %p355
      // Predicated region
      $region9: #{m3sda_loss.1} parent=5 // pred_check
        _
      $region10: #{m3sda_loss.1} parent=5 // pred_check_branch
        %358 = sbr.rel (%p355) target = $region12
      $region11: #{m3sda_loss.1} parent=5 // pred_region
        %s359 = ssub.s32 %s25, 1
      $region12: #{m3sda_loss.1} parent=5 // pred_fallthru
        _
      %p360 = scmp.lt.s32.totalorder %s25, 2
      // Predicated region
      $region13: #{m3sda_loss.1} parent=5 // pred_check
        %p361 = pneg %p360
      $region14: #{m3sda_loss.1} parent=5 // pred_check_branch
        %363 = sbr.rel (%p361) target = $region16
      $region15: #{m3sda_loss.1} parent=5 // pred_region
        // Predicated region
        $region17: #{m3sda_loss.1} parent=15 // pred_check
          %p364 = pneg %p63
        $region18: #{m3sda_loss.1} parent=15 // pred_check_branch
          %366 = sbr.rel (%p364) target = $region20
        $region19: #{m3sda_loss.1} parent=15 // pred_region
          %s367 = sadd.s32 %s32, %s33
          %p368 = scmp.lt.s32.totalorder %s367, 0
          %s369 = scalar_select %p368, %s367, 0
          %s370 = smul.u32 2, %s369
          %p371 = scmp.lt.s32.totalorder %s370, 1
          %s372 = scalar_select %p371, %s370, 1
          %s373 = smul.addr %s372, 8
          %s374 = scalar_lea.vmem %s0, %s373
          %s375 = sadd.s32 %s32, %s33
          %p376 = scmp.lt.s32.totalorder %s375, 0
          %s377 = scalar_select %p376, %s375, 0
          %s378 = smul.u32 2, %s377
        $region20: #{m3sda_loss.1} parent=15 // pred_fallthru
          _
        // Predicated region
        $region21: #{m3sda_loss.1} parent=15 // pred_check
          %p379 = pneg %p95
        $region22: #{m3sda_loss.1} parent=15 // pred_check_branch
          %381 = sbr.rel (%p379) target = $region24
        $region23: #{m3sda_loss.1} parent=15 // pred_region
          %s382 = sadd.s32 %s32, %s33
          %p383 = scmp.lt.s32.totalorder %s382, 0
          %s384 = scalar_select %p383, %s382, 0
          %s385 = smul.u32 2, %s384
          %p386 = scmp.lt.s32.totalorder %s385, 1
          %s387 = scalar_select %p386, %s385, 1
          %s388 = smul.addr %s387, 8
          %s389 = scalar_lea.vmem %s1, %s388
          %s390 = sadd.s32 %s32, %s33
          %p391 = scmp.lt.s32.totalorder %s390, 0
          %s392 = scalar_select %p391, %s390, 0
          %s393 = smul.u32 2, %s392
        $region24: #{m3sda_loss.1} parent=15 // pred_fallthru
          _
        // Predicated region
        $region25: #{m3sda_loss.1} parent=15 // pred_check
          %p394 = pneg %p127
        $region26: #{m3sda_loss.1} parent=15 // pred_check_branch
          %396 = sbr.rel (%p394) target = $region28
        $region27: #{m3sda_loss.1} parent=15 // pred_region
          %s397 = sand.u32 %s117, 1
          %s398 = scalar_lea.sflag [#allocation5], %s397
          %s399 = sand.u32 %s117, 1
          %s400 = smul.addr %s399, 16
          %s401 = scalar_lea.vmem [#allocation4], %s400
          %s402 = sadd.s32 %s32, %s33
          %p403 = scmp.lt.s32.totalorder %s402, 0
          %s404 = scalar_select %p403, %s402, 0
          %s405 = smul.u32 2, %s404
          %407 = vsyncadd %s398, 0
          %s408 = smul.addr %s405, 8
          %s409 = scalar_lea.hbm %s2, %s408
          %s410 = sshll.u32 %s409, 4
          %s411 = int_to_ptr.hbm [resolvable:$true] %s410
          %s412 = sshll.u32 %s401, 4
          %s413 = int_to_ptr.vmem [resolvable:$true] %s412
          %418 = dma.hbm_to_vmem [thread:$0]  %s411, 256, %s413, %s398, 128, 128, 8
        $region28: #{m3sda_loss.1} parent=15 // pred_fallthru
          _
        // Predicated region
        $region29: #{m3sda_loss.1} parent=15 // pred_check
          %p419 = pneg %p159
        $region30: #{m3sda_loss.1} parent=15 // pred_check_branch
          %421 = sbr.rel (%p419) target = $region32
        $region31: #{m3sda_loss.1} parent=15 // pred_region
          %s422 = sand.u32 %s25, 1
          %s423 = scalar_lea.sflag [#allocation7], %s422
          %s424 = sand.u32 %s149, 1
          %s425 = smul.addr %s424, 16
          %s426 = scalar_lea.vmem [#allocation6], %s425
          %s427 = sadd.s32 %s32, %s33
          %p428 = scmp.lt.s32.totalorder %s427, 0
          %s429 = scalar_select %p428, %s427, 0
          %s430 = smul.u32 2, %s429
          %432 = vsyncadd %s423, 0
          %s433 = smul.addr %s430, 8
          %s434 = scalar_lea.hbm %s3, %s433
          %s435 = sshll.u32 %s434, 4
          %s436 = int_to_ptr.hbm [resolvable:$true] %s435
          %s437 = sshll.u32 %s426, 4
          %s438 = int_to_ptr.vmem [resolvable:$true] %s437
          %443 = dma.hbm_to_vmem [thread:$0]  %s436, 256, %s438, %s423, 128, 128, 8
        $region32: #{m3sda_loss.1} parent=15 // pred_fallthru
          _
        // Predicated region
        $region33: #{m3sda_loss.1} parent=15 // pred_check
          %p444 = pneg %p191
        $region34: #{m3sda_loss.1} parent=15 // pred_check_branch
          %446 = sbr.rel (%p444) target = $region36
        $region35: #{m3sda_loss.1} parent=15 // pred_region
          %s447 = sadd.s32 %s32, %s33
          %p448 = scmp.lt.s32.totalorder %s447, 0
          %s449 = scalar_select %p448, %s447, 0
          %s450 = smul.u32 2, %s449
          %p451 = scmp.lt.s32.totalorder %s450, 1
          %s452 = scalar_select %p451, %s450, 1
          %s453 = smul.addr %s452, 8
          %s454 = scalar_lea.vmem %s4, %s453
          %s455 = sadd.s32 %s32, %s33
          %p456 = scmp.lt.s32.totalorder %s455, 0
          %s457 = scalar_select %p456, %s455, 0
          %s458 = smul.u32 2, %s457
        $region36: #{m3sda_loss.1} parent=15 // pred_fallthru
          _
        // Predicated region
        $region37: #{m3sda_loss.1} parent=15 // pred_check
          %p459 = pneg %p223
        $region38: #{m3sda_loss.1} parent=15 // pred_check_branch
          %461 = sbr.rel (%p459) target = $region40
        $region39: #{m3sda_loss.1} parent=15 // pred_region
          %s462 = sand.u32 %s25, 1
          %s463 = scalar_lea.sflag [#allocation7], %s462
          %s464 = sand.u32 %s213, 1
          %s465 = smul.addr %s464, 16
          %s466 = scalar_lea.vmem [#allocation8], %s465
          %s467 = sadd.s32 %s32, %s33
          %p468 = scmp.lt.s32.totalorder %s467, 0
          %s469 = scalar_select %p468, %s467, 0
          %s470 = smul.u32 2, %s469
          %472 = vsyncadd %s463, 0
          %s473 = smul.addr %s470, 8
          %s474 = scalar_lea.hbm %s5, %s473
          %s475 = sshll.u32 %s474, 4
          %s476 = int_to_ptr.hbm [resolvable:$true] %s475
          %s477 = sshll.u32 %s466, 4
          %s478 = int_to_ptr.vmem [resolvable:$true] %s477
          %483 = dma.hbm_to_vmem [thread:$0]  %s476, 256, %s478, %s463, 128, 128, 8
        $region40: #{m3sda_loss.1} parent=15 // pred_fallthru
          _
        // Predicated region
        $region41: #{m3sda_loss.1} parent=15 // pred_check
          %p484 = pneg %p255
        $region42: #{m3sda_loss.1} parent=15 // pred_check_branch
          %486 = sbr.rel (%p484) target = $region44
        $region43: #{m3sda_loss.1} parent=15 // pred_region
          %s487 = sand.u32 %s25, 1
          %s488 = scalar_lea.sflag [#allocation10], %s487
          %s489 = sand.u32 %s245, 1
          %s490 = smul.addr %s489, 16
          %s491 = scalar_lea.vmem [#allocation9], %s490
          %s492 = sadd.s32 %s32, %s33
          %p493 = scmp.lt.s32.totalorder %s492, 0
          %s494 = scalar_select %p493, %s492, 0
          %s495 = smul.u32 2, %s494
          %497 = vsyncadd %s488, 0
          %s498 = smul.addr %s495, 8
          %s499 = scalar_lea.hbm %s6, %s498
          %s500 = sshll.u32 %s499, 4
          %s501 = int_to_ptr.hbm [resolvable:$true] %s500
          %s502 = sshll.u32 %s491, 4
          %s503 = int_to_ptr.vmem [resolvable:$true] %s502
          %508 = dma.hbm_to_vmem [thread:$0]  %s501, 256, %s503, %s488, 128, 128, 8
        $region44: #{m3sda_loss.1} parent=15 // pred_fallthru
          _
        // Predicated region
        $region45: #{m3sda_loss.1} parent=15 // pred_check
          %p509 = pneg %p287
        $region46: #{m3sda_loss.1} parent=15 // pred_check_branch
          %511 = sbr.rel (%p509) target = $region48
        $region47: #{m3sda_loss.1} parent=15 // pred_region
          %s512 = sand.u32 %s25, 1
          %s513 = scalar_lea.sflag [#allocation10], %s512
          %s514 = sand.u32 %s277, 1
          %s515 = smul.addr %s514, 16
          %s516 = scalar_lea.vmem [#allocation11], %s515
          %s517 = sadd.s32 %s32, %s33
          %p518 = scmp.lt.s32.totalorder %s517, 0
          %s519 = scalar_select %p518, %s517, 0
          %s520 = smul.u32 2, %s519
          %522 = vsyncadd %s513, 0
          %s523 = smul.addr %s520, 8
          %s524 = scalar_lea.hbm %s7, %s523
          %s525 = sshll.u32 %s524, 4
          %s526 = int_to_ptr.hbm [resolvable:$true] %s525
          %s527 = sshll.u32 %s516, 4
          %s528 = int_to_ptr.vmem [resolvable:$true] %s527
          %533 = dma.hbm_to_vmem [thread:$0]  %s526, 256, %s528, %s513, 128, 128, 8
        $region48: #{m3sda_loss.1} parent=15 // pred_fallthru
          _
      $region16: #{m3sda_loss.1} parent=5 // pred_fallthru
        _
      %p534 = scmp.le.s32.totalorder 1, %s25
      %p535 = scmp.lt.s32.totalorder %s25, 3
      %p536 = pnand %p534, %p535
      %p537 = pneg %p536
      // Predicated region
      $region49: #{m3sda_loss.1} parent=5 // pred_check
        _
      $region50: #{m3sda_loss.1} parent=5 // pred_check_branch
        %539 = sbr.rel (%p536) target = $region52
      $region51: #{m3sda_loss.1} parent=5 // pred_region
        %s540 = ssub.s32 %s25, 1
        %s541 = sand.u32 %s120, 1
        %s542 = scalar_lea.sflag [#allocation5], %s541
        %s543 = sand.u32 %s120, 1
        %s544 = smul.addr %s543, 16
        %s545 = scalar_lea.vmem [#allocation4], %s544
        // Predicated region
        $region53: #{m3sda_loss.1} parent=51 // pred_check
          %p546 = pneg %p133
        $region54: #{m3sda_loss.1} parent=51 // pred_check_branch
          %548 = sbr.rel (%p546) target = $region56
        $region55: #{m3sda_loss.1} parent=51 // pred_region
          %550 = dma.done %s542, 256
        $region56: #{m3sda_loss.1} parent=51 // pred_fallthru
          _
        %s551 = sand.u32 %s30, 1
        %s552 = scalar_lea.sflag [#allocation7], %s551
        %s553 = sand.u32 %s152, 1
        %s554 = smul.addr %s553, 16
        %s555 = scalar_lea.vmem [#allocation6], %s554
        // Predicated region
        $region57: #{m3sda_loss.1} parent=51 // pred_check
          %p556 = pneg %p165
        $region58: #{m3sda_loss.1} parent=51 // pred_check_branch
          %558 = sbr.rel (%p556) target = $region60
        $region59: #{m3sda_loss.1} parent=51 // pred_region
          %560 = dma.done %s552, 256
        $region60: #{m3sda_loss.1} parent=51 // pred_fallthru
          _
        %s561 = sand.u32 %s30, 1
        %s562 = scalar_lea.sflag [#allocation7], %s561
        %s563 = sand.u32 %s216, 1
        %s564 = smul.addr %s563, 16
        %s565 = scalar_lea.vmem [#allocation8], %s564
        // Predicated region
        $region61: #{m3sda_loss.1} parent=51 // pred_check
          %p566 = pneg %p229
        $region62: #{m3sda_loss.1} parent=51 // pred_check_branch
          %568 = sbr.rel (%p566) target = $region64
        $region63: #{m3sda_loss.1} parent=51 // pred_region
          %570 = dma.done %s562, 256
        $region64: #{m3sda_loss.1} parent=51 // pred_fallthru
          _
        %s571 = sand.u32 %s30, 1
        %s572 = scalar_lea.sflag [#allocation10], %s571
        %s573 = sand.u32 %s248, 1
        %s574 = smul.addr %s573, 16
        %s575 = scalar_lea.vmem [#allocation9], %s574
        // Predicated region
        $region65: #{m3sda_loss.1} parent=51 // pred_check
          %p576 = pneg %p261
        $region66: #{m3sda_loss.1} parent=51 // pred_check_branch
          %578 = sbr.rel (%p576) target = $region68
        $region67: #{m3sda_loss.1} parent=51 // pred_region
          %580 = dma.done %s572, 256
        $region68: #{m3sda_loss.1} parent=51 // pred_fallthru
          _
        %s581 = sand.u32 %s30, 1
        %s582 = scalar_lea.sflag [#allocation10], %s581
        %s583 = sand.u32 %s280, 1
        %s584 = smul.addr %s583, 16
        %s585 = scalar_lea.vmem [#allocation11], %s584
        // Predicated region
        $region69: #{m3sda_loss.1} parent=51 // pred_check
          %p586 = pneg %p293
        $region70: #{m3sda_loss.1} parent=51 // pred_check_branch
          %588 = sbr.rel (%p586) target = $region72
        $region71: #{m3sda_loss.1} parent=51 // pred_region
          %590 = dma.done %s582, 256
        $region72: #{m3sda_loss.1} parent=51 // pred_fallthru
          _
        %s591 = sadd.s32 %s34, %s35
        %p592 = scmp.lt.s32.totalorder %s591, 0
        %s593 = scalar_select %p592, %s591, 0
        %s594 = smul.u32 2, %s593
        %p595 = scmp.lt.s32.totalorder %s594, 1
        %s596 = scalar_select %p595, %s594, 1
        %s597 = smul.addr %s596, 8
        %s598 = scalar_lea.vmem %s0, %s597
        %p599 = pneg %p69
        %p600 = pneg %p66
        %s601 = sadd.s32 %s34, %s35
        %p602 = scmp.lt.s32.totalorder %s601, 0
        %s603 = scalar_select %p602, %s601, 0
        %s604 = smul.u32 2, %s603
        %p605 = scmp.lt.s32.totalorder %s604, 1
        %s606 = scalar_select %p605, %s604, 1
        %s607 = smul.addr %s606, 8
        %s608 = scalar_lea.vmem %s1, %s607
        %p609 = pneg %p101
        %p610 = pneg %p98
        %s611 = sand.u32 %s120, 1
        %s612 = scalar_lea.sflag [#allocation5], %s611
        %s613 = sand.u32 %s120, 1
        %s614 = smul.addr %s613, 16
        %s615 = scalar_lea.vmem [#allocation4], %s614
        %p616 = pneg %p133
        %p617 = pneg %p130
        %s618 = sand.u32 %s30, 1
        %s619 = scalar_lea.sflag [#allocation7], %s618
        %s620 = sand.u32 %s152, 1
        %s621 = smul.addr %s620, 16
        %s622 = scalar_lea.vmem [#allocation6], %s621
        %p623 = pneg %p165
        %p624 = pneg %p162
        %s625 = sadd.s32 %s34, %s35
        %p626 = scmp.lt.s32.totalorder %s625, 0
        %s627 = scalar_select %p626, %s625, 0
        %s628 = smul.u32 2, %s627
        %p629 = scmp.lt.s32.totalorder %s628, 1
        %s630 = scalar_select %p629, %s628, 1
        %s631 = smul.addr %s630, 8
        %s632 = scalar_lea.vmem %s4, %s631
        %p633 = pneg %p197
        %p634 = pneg %p194
        %s635 = sand.u32 %s30, 1
        %s636 = scalar_lea.sflag [#allocation7], %s635
        %s637 = sand.u32 %s216, 1
        %s638 = smul.addr %s637, 16
        %s639 = scalar_lea.vmem [#allocation8], %s638
        %p640 = pneg %p229
        %p641 = pneg %p226
        %s642 = sand.u32 %s30, 1
        %s643 = scalar_lea.sflag [#allocation10], %s642
        %s644 = sand.u32 %s248, 1
        %s645 = smul.addr %s644, 16
        %s646 = scalar_lea.vmem [#allocation9], %s645
        %p647 = pneg %p261
        %p648 = pneg %p258
        %s649 = sand.u32 %s30, 1
        %s650 = scalar_lea.sflag [#allocation10], %s649
        %s651 = sand.u32 %s280, 1
        %s652 = smul.addr %s651, 16
        %s653 = scalar_lea.vmem [#allocation11], %s652
        %p654 = pneg %p293
        %p655 = pneg %p290
        %p656 = pneg %p319
        %p657 = pneg %p316
        %p658 = scmp.lt.s32.totalorder %s34, 1
        %s659 = scalar_select %p658, %s34, 1
        %s660 = smul.addr %s659, 8
        %s661 = scalar_lea.vmem %s8, %s660
        %p662 = pneg %p345
        %p663 = pneg %p342
        %p664 = scmp.lt.s32.totalorder %s34, 1
        %s665 = scalar_select %p664, %s34, 1
        %s666 = smul.addr %s665, 8
        %s667 = scalar_lea.vmem %s9, %s666
        %s668 = sadd.s32 %s34, %s35
        %p669 = scmp.lt.s32.totalorder %s668, 0
        %s670 = scalar_select %p669, %s668, 0
        %s671 = smul.u32 2, %s670
        %p672 = scmp.lt.s32.totalorder %s671, 1
        %s673 = scalar_select %p672, %s671, 1
        %s674 = smul.addr %s673, 8
        %s675 = scalar_lea.vmem %s0, %s674
        %s676 = sadd.s32 %s34, %s35
        %p677 = scmp.lt.s32.totalorder %s676, 0
        %s678 = scalar_select %p677, %s676, 0
        %s679 = smul.u32 2, %s678
        %s680 = sadd.s32 %s34, %s35
        %p681 = scmp.lt.s32.totalorder %s680, 0
        %s682 = scalar_select %p681, %s680, 0
        %s683 = smul.u32 2, %s682
        %p684 = scmp.lt.s32.totalorder %s683, 1
        %s685 = scalar_select %p684, %s683, 1
        %s686 = smul.addr %s685, 8
        %s687 = scalar_lea.vmem %s1, %s686
        %s688 = sadd.s32 %s34, %s35
        %p689 = scmp.lt.s32.totalorder %s688, 0
        %s690 = scalar_select %p689, %s688, 0
        %s691 = smul.u32 2, %s690
        %s692 = sadd.s32 %s34, %s35
        %p693 = scmp.lt.s32.totalorder %s692, 0
        %s694 = scalar_select %p693, %s692, 0
        %s695 = smul.u32 2, %s694
        %s696 = sadd.s32 %s34, %s35
        %p697 = scmp.lt.s32.totalorder %s696, 0
        %s698 = scalar_select %p697, %s696, 0
        %s699 = smul.u32 2, %s698
        %s700 = sadd.s32 %s34, %s35
        %p701 = scmp.lt.s32.totalorder %s700, 0
        %s702 = scalar_select %p701, %s700, 0
        %s703 = smul.u32 2, %s702
        %p704 = scmp.lt.s32.totalorder %s703, 1
        %s705 = scalar_select %p704, %s703, 1
        %s706 = smul.addr %s705, 8
        %s707 = scalar_lea.vmem %s4, %s706
        %s708 = sadd.s32 %s34, %s35
        %p709 = scmp.lt.s32.totalorder %s708, 0
        %s710 = scalar_select %p709, %s708, 0
        %s711 = smul.u32 2, %s710
        %s712 = sadd.s32 %s34, %s35
        %p713 = scmp.lt.s32.totalorder %s712, 0
        %s714 = scalar_select %p713, %s712, 0
        %s715 = smul.u32 2, %s714
        %s716 = sadd.s32 %s34, %s35
        %p717 = scmp.lt.s32.totalorder %s716, 0
        %s718 = scalar_select %p717, %s716, 0
        %s719 = smul.u32 2, %s718
        %s720 = sadd.s32 %s34, %s35
        %p721 = scmp.lt.s32.totalorder %s720, 0
        %s722 = scalar_select %p721, %s720, 0
        %s723 = smul.u32 2, %s722
        %p724 = scmp.lt.s32.totalorder %s34, 1
        %s725 = scalar_select %p724, %s34, 1
        %s726 = smul.addr %s725, 8
        %s727 = scalar_lea.vmem %s8, %s726
        %p728 = scmp.lt.s32.totalorder %s34, 1
        %s729 = scalar_select %p728, %s34, 1
        %s730 = smul.addr %s729, 8
        %s731 = scalar_lea.vmem %s9, %s730
        %p732 = scmp.eq.s32.totalorder %s35, 0
        // Predicated region
        $region73: #{m3sda_loss.1} parent=51 // pred_check
          %p733 = pneg %p732
        $region74: #{m3sda_loss.1} parent=51 // pred_check_branch
          %735 = sbr.rel (%p733) target = $region76
        $region75: #{m3sda_loss.1} parent=51 // pred_region
          %vm736 = vcmask 7168
          %737 = vst.msk [vmem:[#allocation2] sm:$0xff] %vm736, 0.0
          %vm738 = vcmask 3072
          %739 = vst.msk [vmem:[#allocation2 + $0x8] sm:$0xf] %vm738, 0.0
          %740 = vst.msk [vmem:[#allocation3] sm:$0xff] %vm736, 0.0
          %741 = vst.msk [vmem:[#allocation3 + $0x8] sm:$0xf] %vm738, 0.0
        $region76: #{m3sda_loss.1} parent=51 // pred_fallthru
          _
        %s742 = sadd.s32 %s34, %s35
        %v743 = vlaneseq
        %v744 = vshrl.u32 %v743, 7
        %v745 = vadd.s32 %v744, 8
        %s746 = smul.u32 %s742, 12
        %v747 = vstv %s746
        %v748 = vadd.s32 %v744, %v747
        %v749 = vadd.s32 %v745, %v747
        %vm750 = vcmp.lt.s32.totalorder %v748, 12
        %vm751 = vcmp.lt.s32.totalorder %v749, 12
        %v752 = vld [vmem:[%s687] sm:$0xff]
        %v753 = vld [vmem:[%s687 + $0x8] sm:$0xf]
        %v754 = vsel %vm750, 1, 0
        %v755 = vsel %vm751, 1, 0
        %vm756 = vcmp.eq.s32.totalorder %v754, 1
        %vm757 = vcmp.eq.s32.totalorder %v755, 1
        %v758 = vsel %vm756, %v752, 0.0
        %v759 = vsel %vm757, %v753, 0.0
        %v760 = vld [vmem:[%s545] sm:$0xff]
        %v761 = vld [vmem:[%s545 + $0x8] sm:$0xf]
        %v762 = vsel %vm756, %v760, 0.0
        %v763 = vsel %vm757, %v761, 0.0
        %v764 = vld [vmem:[%s555] sm:$0xff]
        %v765 = vld [vmem:[%s555 + $0x8] sm:$0xf]
        %v766 = vsel %vm756, %v764, 0.0
        %v767 = vsel %vm757, %v765, 0.0
        %v768 = vld [vmem:[%s707] sm:$0xff]
        %v769 = vld [vmem:[%s707 + $0x8] sm:$0xf]
        %v770 = vsel %vm756, %v768, 0.0
        %v771 = vsel %vm757, %v769, 0.0
        %v772 = vadd.f32 %v758, %v762
        %v773 = vadd.f32 %v759, %v763
        %v774 = vadd.f32 %v772, %v766
        %v775 = vadd.f32 %v773, %v767
        %v776 = vadd.f32 %v774, %v770
        %v777 = vadd.f32 %v775, %v771
        %v778 = vmul.f32 %v758, %v758
        %v779 = vmul.f32 %v759, %v759
        %v780 = vmul.f32 %v762, %v762
        %v781 = vmul.f32 %v763, %v763
        %v782 = vadd.f32 %v778, %v780
        %v783 = vadd.f32 %v779, %v781
        %v784 = vmul.f32 %v766, %v766
        %v785 = vmul.f32 %v767, %v767
        %v786 = vadd.f32 %v782, %v784
        %v787 = vadd.f32 %v783, %v785
        %v788 = vmul.f32 %v770, %v770
        %v789 = vmul.f32 %v771, %v771
        %v790 = vadd.f32 %v786, %v788
        %v791 = vadd.f32 %v787, %v789
        %v792 = vmul.f32 %v790, 4.0
        %v793 = vmul.f32 %v791, 4.0
        %v794 = vmul.f32 %v776, %v776
        %v795 = vmul.f32 %v777, %v777
        %v796 = vsub.f32 %v792, %v794
        %v797 = vsub.f32 %v793, %v795
        %v798 = vld [vmem:[#allocation3] sm:$0xff]
        %v799 = vld [vmem:[#allocation3 + $0x8] sm:$0xf]
        %vm800 = vcmask 261120
        %v801 = vsel %vm800, %v796, 0.0
        %802 = vadd.xlane.f32.xlu0 %v801
        %v803 = vpop.xlane.xlu0 %802
        %vm804 = vcmask 257024
        %v805 = vsel %vm804, %v797, 0.0
        %806 = vadd.xlane.f32.xlu0 %v805
        %v807 = vpop.xlane.xlu0 %806
        %v808 = vadd.f32 %v798, %v803
        %v809 = vadd.f32 %v799, %v807
        %vm810 = vcmask 7168
        %811 = vst.msk [vmem:[#allocation3] sm:$0xff] %vm810, %v808
        %vm812 = vcmask 3072
        %813 = vst.msk [vmem:[#allocation3 + $0x8] sm:$0xf] %vm812, %v809
        %v814 = vld [vmem:[%s675] sm:$0xff]
        %v815 = vld [vmem:[%s675 + $0x8] sm:$0xf]
        %v816 = vld [vmem:[%s565] sm:$0xff]
        %v817 = vld [vmem:[%s565 + $0x8] sm:$0xf]
        %vm818 = vcmask 130048
        %v819 = vsel %vm818, %v816, -inf
        %820 = vmax.xlane.f32.xlu0 %v819
        %v821 = vpop.xlane.xlu0 %820
        %vm822 = vcmask 125952
        %v823 = vsel %vm822, %v817, -inf
        %824 = vmax.xlane.f32.xlu0 %v823
        %v825 = vpop.xlane.xlu0 %824
        %v826 = vsub.f32 %v816, %v821
        %v827 = vsub.f32 %v817, %v825
        %v828 = vmul.f32 %v826, 1.442695
        %v829 = vpow.pop %v828
        %v830 = vmul.f32 %v827, 1.442695
        %v831 = vpow.pop %v830
        %v832 = vsel %vm818, %v829, 0.0
        %833 = vadd.xlane.f32.xlu0 %v832
        %v834 = vpop.xlane.xlu0 %833
        %v835 = vsel %vm822, %v831, 0.0
        %836 = vadd.xlane.f32.xlu0 %v835
        %v837 = vpop.xlane.xlu0 %836
        %v838 = vlog2.pop %v834
        %v839 = vmul.f32 %v838, 0.6931472
        %v840 = vlog2.pop %v837
        %v841 = vmul.f32 %v840, 0.6931472
        %v842 = vadd.f32 %v821, %v839
        %v843 = vadd.f32 %v825, %v841
        %v844 = vlaneseq
        %v845 = vand.u32 %v844, 127
        %846 = vset.pattern.permute.xlu0 0
        %847 = vperm.xlu0 %846, %v814
        %v848 = vpop.permute.xlu0 %847
        %849 = vset.pattern.permute.xlu0 0
        %850 = vperm.xlu0 %849, %v815
        %v851 = vpop.permute.xlu0 %850
        %vm852 = vcmp.eq.s32.totalorder %v845, %v848
        %vm853 = vcmp.eq.s32.totalorder %v845, %v851
        %v854 = vsel %vm852, %v816, 0.0
        %v855 = vsel %vm853, %v817, 0.0
        %v856 = vsel %vm818, %v854, 0.0
        %857 = vadd.xlane.f32.xlu0 %v856
        %v858 = vpop.xlane.xlu0 %857
        %v859 = vsel %vm822, %v855, 0.0
        %860 = vadd.xlane.f32.xlu0 %v859
        %v861 = vpop.xlane.xlu0 %860
        %v862 = vsub.f32 %v842, %v858
        %v863 = vsub.f32 %v843, %v861
        %v864 = vld [vmem:[%s575] sm:$0xff]
        %v865 = vld [vmem:[%s575 + $0x8] sm:$0xf]
        %v866 = vsel %vm818, %v864, -inf
        %867 = vmax.xlane.f32.xlu0 %v866
        %v868 = vpop.xlane.xlu0 %867
        %v869 = vsel %vm822, %v865, -inf
        %870 = vmax.xlane.f32.xlu0 %v869
        %v871 = vpop.xlane.xlu0 %870
        %v872 = vsub.f32 %v864, %v868
        %v873 = vsub.f32 %v865, %v871
        %v874 = vmul.f32 %v872, 1.442695
        %v875 = vpow.pop %v874
        %v876 = vmul.f32 %v873, 1.442695
        %v877 = vpow.pop %v876
        %v878 = vsel %vm818, %v875, 0.0
        %879 = vadd.xlane.f32.xlu0 %v878
        %v880 = vpop.xlane.xlu0 %879
        %v881 = vsel %vm822, %v877, 0.0
        %882 = vadd.xlane.f32.xlu0 %v881
        %v883 = vpop.xlane.xlu0 %882
        %v884 = vlog2.pop %v880
        %v885 = vmul.f32 %v884, 0.6931472
        %v886 = vlog2.pop %v883
        %v887 = vmul.f32 %v886, 0.6931472
        %v888 = vadd.f32 %v868, %v885
        %v889 = vadd.f32 %v871, %v887
        %890 = vset.pattern.permute.xlu0 1
        %891 = vperm.xlu0 %890, %v814
        %v892 = vpop.permute.xlu0 %891
        %893 = vset.pattern.permute.xlu0 1
        %894 = vperm.xlu0 %893, %v815
        %v895 = vpop.permute.xlu0 %894
        %vm896 = vcmp.eq.s32.totalorder %v845, %v892
        %vm897 = vcmp.eq.s32.totalorder %v845, %v895
        %v898 = vsel %vm896, %v864, 0.0
        %v899 = vsel %vm897, %v865, 0.0
        %v900 = vsel %vm818, %v898, 0.0
        %901 = vadd.xlane.f32.xlu0 %v900
        %v902 = vpop.xlane.xlu0 %901
        %v903 = vsel %vm822, %v899, 0.0
        %904 = vadd.xlane.f32.xlu0 %v903
        %v905 = vpop.xlane.xlu0 %904
        %v906 = vsub.f32 %v888, %v902
        %v907 = vsub.f32 %v889, %v905
        %v908 = vadd.f32 %v862, %v906
        %v909 = vadd.f32 %v863, %v907
        %v910 = vld [vmem:[%s585] sm:$0xff]
        %v911 = vld [vmem:[%s585 + $0x8] sm:$0xf]
        %v912 = vsel %vm818, %v910, -inf
        %913 = vmax.xlane.f32.xlu0 %v912
        %v914 = vpop.xlane.xlu0 %913
        %v915 = vsel %vm822, %v911, -inf
        %916 = vmax.xlane.f32.xlu0 %v915
        %v917 = vpop.xlane.xlu0 %916
        %v918 = vsub.f32 %v910, %v914
        %v919 = vsub.f32 %v911, %v917
        %v920 = vmul.f32 %v918, 1.442695
        %v921 = vpow.pop %v920
        %v922 = vmul.f32 %v919, 1.442695
        %v923 = vpow.pop %v922
        %v924 = vsel %vm818, %v921, 0.0
        %925 = vadd.xlane.f32.xlu0 %v924
        %v926 = vpop.xlane.xlu0 %925
        %v927 = vsel %vm822, %v923, 0.0
        %928 = vadd.xlane.f32.xlu0 %v927
        %v929 = vpop.xlane.xlu0 %928
        %v930 = vlog2.pop %v926
        %v931 = vmul.f32 %v930, 0.6931472
        %v932 = vlog2.pop %v929
        %v933 = vmul.f32 %v932, 0.6931472
        %v934 = vadd.f32 %v914, %v931
        %v935 = vadd.f32 %v917, %v933
        %936 = vset.pattern.permute.xlu0 2
        %937 = vperm.xlu0 %936, %v814
        %v938 = vpop.permute.xlu0 %937
        %939 = vset.pattern.permute.xlu0 2
        %940 = vperm.xlu0 %939, %v815
        %v941 = vpop.permute.xlu0 %940
        %vm942 = vcmp.eq.s32.totalorder %v845, %v938
        %vm943 = vcmp.eq.s32.totalorder %v845, %v941
        %v944 = vsel %vm942, %v910, 0.0
        %v945 = vsel %vm943, %v911, 0.0
        %v946 = vsel %vm818, %v944, 0.0
        %947 = vadd.xlane.f32.xlu0 %v946
        %v948 = vpop.xlane.xlu0 %947
        %v949 = vsel %vm822, %v945, 0.0
        %950 = vadd.xlane.f32.xlu0 %v949
        %v951 = vpop.xlane.xlu0 %950
        %v952 = vsub.f32 %v934, %v948
        %v953 = vsub.f32 %v935, %v951
        %v954 = vadd.f32 %v908, %v952
        %v955 = vadd.f32 %v909, %v953
        %v956 = vld [vmem:[#allocation2] sm:$0xff]
        %v957 = vld [vmem:[#allocation2 + $0x8] sm:$0xf]
        %v958 = vsel %vm750, %v954, 0.0
        %v959 = vsel %vm751, %v955, 0.0
        %v960 = vadd.f32 %v956, %v958
        %v961 = vadd.f32 %v957, %v959
        %962 = vst.msk [vmem:[#allocation2] sm:$0xff] %vm810, %v960
        %963 = vst.msk [vmem:[#allocation2 + $0x8] sm:$0xf] %vm812, %v961
        // Predicated region
        $region77: #{m3sda_loss.1} parent=51 // pred_check
          %p964 = pneg %p732
        $region78: #{m3sda_loss.1} parent=51 // pred_check_branch
          %966 = sbr.rel (%p964) target = $region80
        $region79: #{m3sda_loss.1} parent=51 // pred_region
          %v967 = vld [vmem:[#allocation2] sm:$0xff]
          %v968 = vld [vmem:[#allocation2 + $0x8] sm:$0xf]
          %v969 = vsel %vm810, %v967, 0.0
          %v970 = vsel %vm812, %v968, 0.0
          %v971 = vadd.f32 %v969, %v970
          %972 = vadd.xlane.f32.xlu0 %v971
          %v973 = vpop.xlane.xlu0 %972
          %v974 = vrot.slane %v973, 4
          %v975 = vadd.f32 %v973, %v974
          %v976 = vrot.slane %v975, 2
          %v977 = vadd.f32 %v975, %v976
          %v978 = vrot.slane %v977, 1
          %v979 = vadd.f32 %v977, %v978
          %s980 = vtos %v979
          %v981 = vstv %s980
          %v982 = vadd.f32 %v981, 0.0
          %983 = vst [vmem:[%s727] sm:$0xff] %v982
          %v984 = vld [vmem:[#allocation3] sm:$0xff]
          %v985 = vld [vmem:[#allocation3 + $0x8] sm:$0xf]
          %v986 = vsel %vm810, %v984, 0.0
          %v987 = vsel %vm812, %v985, 0.0
          %v988 = vadd.f32 %v986, %v987
          %989 = vadd.xlane.f32.xlu0 %v988
          %v990 = vpop.xlane.xlu0 %989
          %v991 = vrot.slane %v990, 4
          %v992 = vadd.f32 %v990, %v991
          %v993 = vrot.slane %v992, 2
          %v994 = vadd.f32 %v992, %v993
          %v995 = vrot.slane %v994, 1
          %v996 = vadd.f32 %v994, %v995
          %s997 = vtos %v996
          %v998 = vstv %s997
          %v999 = vadd.f32 %v998, 0.0
          %1000 = vst [vmem:[%s731] sm:$0xff] %v999
        $region80: #{m3sda_loss.1} parent=51 // pred_fallthru
          _
        %p1001 = scmp.lt.s32.totalorder %s34, 1
        %s1002 = scalar_select %p1001, %s34, 1
        %s1003 = smul.addr %s1002, 8
        %s1004 = scalar_lea.vmem %s8, %s1003
        %p1005 = scmp.lt.s32.totalorder %s34, 1
        %s1006 = scalar_select %p1005, %s34, 1
        %s1007 = smul.addr %s1006, 8
        %s1008 = scalar_lea.vmem %s9, %s1007
        // Predicated region
        $region81: #{m3sda_loss.1} parent=51 // pred_check
          %p1009 = pneg %p316
        $region82: #{m3sda_loss.1} parent=51 // pred_check_branch
          %1011 = sbr.rel (%p1009) target = $region84
        $region83: #{m3sda_loss.1} parent=51 // pred_region
          _
        $region84: #{m3sda_loss.1} parent=51 // pred_fallthru
          _
        // Predicated region
        $region85: #{m3sda_loss.1} parent=51 // pred_check
          %p1012 = pneg %p342
        $region86: #{m3sda_loss.1} parent=51 // pred_check_branch
          %1014 = sbr.rel (%p1012) target = $region88
        $region87: #{m3sda_loss.1} parent=51 // pred_region
          _
        $region88: #{m3sda_loss.1} parent=51 // pred_fallthru
          _
      $region52: #{m3sda_loss.1} parent=5 // pred_fallthru
        _
      %p1015 = scmp.le.s32.totalorder 2, %s25
      // Predicated region
      $region89: #{m3sda_loss.1} parent=5 // pred_check
        %p1016 = pneg %p1015
      $region90: #{m3sda_loss.1} parent=5 // pred_check_branch
        %1018 = sbr.rel (%p1016) target = $region92
      $region91: #{m3sda_loss.1} parent=5 // pred_region
        %s1019 = ssub.s32 %s25, 2
        // Predicated region
        $region93: #{m3sda_loss.1} parent=91 // pred_check
          %p1020 = pneg %p322
        $region94: #{m3sda_loss.1} parent=91 // pred_check_branch
          %1022 = sbr.rel (%p1020) target = $region96
        $region95: #{m3sda_loss.1} parent=91 // pred_region
          %p1023 = scmp.lt.s32.totalorder %s36, 1
          %s1024 = scalar_select %p1023, %s36, 1
          %s1025 = smul.addr %s1024, 8
          %s1026 = scalar_lea.vmem %s8, %s1025
        $region96: #{m3sda_loss.1} parent=91 // pred_fallthru
          _
        // Predicated region
        $region97: #{m3sda_loss.1} parent=91 // pred_check
          %p1027 = pneg %p348
        $region98: #{m3sda_loss.1} parent=91 // pred_check_branch
          %1029 = sbr.rel (%p1027) target = $region100
        $region99: #{m3sda_loss.1} parent=91 // pred_region
          %p1030 = scmp.lt.s32.totalorder %s36, 1
          %s1031 = scalar_select %p1030, %s36, 1
          %s1032 = smul.addr %s1031, 8
          %s1033 = scalar_lea.vmem %s9, %s1032
        $region100: #{m3sda_loss.1} parent=91 // pred_fallthru
          _
      $region92: #{m3sda_loss.1} parent=5 // pred_fallthru
        _
    $region6: #{m3sda_loss.1} parent=1 // loop_footer
      %s29 = sadd.s32 1, %s25
    $region7: #{m3sda_loss.1} parent=1 // loop_footer_branch
      %24 = sbr.rel target = $region3
    $region8: #{m3sda_loss.1} parent=1 // loop_exit
      _
    %1034 = vsyncpa [#allocation5], 1
    %s1035 = scalar_lea.sflag [#allocation5], 1
    %1036 = vsyncpa %s1035, 1
    %1037 = vsyncpa [#allocation7], 1
    %s1038 = scalar_lea.sflag [#allocation7], 1
    %1039 = vsyncpa %s1038, 1
    %1040 = vsyncpa [#allocation10], 1
    %s1041 = scalar_lea.sflag [#allocation10], 1
    %1042 = vsyncpa %s1041, 1

</llo_original>
